<compile_context>
chip_gen: v5e
topology: v5e:2x2
jax: 0.10.0
libtpu: 0.0.40
codegen_flags: <defaults>
</compile_context>

<pallas_src>
import jax
import jax.numpy as jnp
from jax.experimental import pallas as pl
from jax.experimental.pallas import tpu as pltpu


def mlp_kernel(xT_ref, wb1_ref, w2T_ref, b2_ref, oT_ref):
    # xT_ref : (1, B)          batch on the lane axis
    # wb1_ref: (n_hidden, 2)   col 0 = W1 (n_in == 1), col 1 = b1
    # w2T_ref: (n_out, n_hidden)
    # b2_ref : (1, 1) scalar in SMEM
    # oT_ref : (n_out, B)      lane-dense output
    x_row = xT_ref[...]                      # (1, B)
    w1_col = wb1_ref[:, 0:1]                 # (n_hidden, 1)
    b1_col = wb1_ref[:, 1:2]                 # (n_hidden, 1)

    # Layer 1: K=1 "matmul" done as a VPU broadcast outer product (no MXU round trip).
    hT = jnp.maximum(w1_col * x_row + b1_col, 0.0)          # (n_hidden, B)

    # Layer 2: (n_out, n_hidden) @ (n_hidden, B) -> full 128-lane MXU column.
    oT = jnp.dot(w2T_ref[...], hT, preferred_element_type=jnp.float32)  # (n_out, B)
    oT_ref[...] = (oT + b2_ref[0, 0]).astype(oT_ref.dtype)


def net_forward(x, w1, b1, w2, b2):
    """x: (B, 1); w1: (1, n_hidden); b1: (n_hidden,); w2: (n_hidden, n_out); b2: (n_out,)."""
    B, n_in = x.shape
    assert n_in == 1, "spec's Net is driven with n_input == 1 (x = linspace unsqueezed)"
    n_hidden = w1.shape[1]
    n_out = w2.shape[1]

    # Layout plumbing (free in the wrapper): batch -> lane axis, fold b1 into w1's tile.
    xT = x.T                                                        # (1, B)
    wb1 = jnp.concatenate([w1.T, b1.reshape(n_hidden, 1)], axis=1)  # (n_hidden, 2)
    w2T = w2.T                                                      # (n_out, n_hidden)
    b2s = b2.reshape(1, 1).astype(jnp.float32)                      # SMEM scalar

    vmem = pl.BlockSpec(memory_space=pltpu.MemorySpace.VMEM)
    smem = pl.BlockSpec(memory_space=pltpu.MemorySpace.SMEM)

    flops = 2 * B * (n_in * n_hidden + n_hidden * n_out)
    bytes_accessed = 4 * (xT.size + wb1.size + w2T.size + 1 + n_out * B)

    oT = pl.pallas_call(
        mlp_kernel,
        out_shape=jax.ShapeDtypeStruct((n_out, B), jnp.float32),
        in_specs=[vmem, vmem, vmem, smem],
        out_specs=vmem,
        cost_estimate=pl.CostEstimate(
            flops=flops, transcendentals=0, bytes_accessed=bytes_accessed),
    )(xT, wb1, w2T, b2s)

    # TODO(synk): if B or n_hidden grow, tile batch with grid=(B//TB,) and
    # dimension_semantics=("parallel",) so v7x's second TensorCore is used.
    return oT.T                                                      # (B, n_out)


def init_linear_params(key, fan_in, fan_out):
    # PyTorch nn.Linear init: U(-1/sqrt(fan_in), 1/sqrt(fan_in)) for weight and bias.
    kw, kb = jax.random.split(key)
    bound = 1.0 / jnp.sqrt(jnp.float32(fan_in))
    # stored as (fan_in, fan_out) so the math is x @ W + b (== PyTorch Linear with weight.T)
    w = jax.random.uniform(kw, (fan_in, fan_out), jnp.float32, -bound, bound)
    b = jax.random.uniform(kb, (fan_out,), jnp.float32, -bound, bound)
    return w, b


def reference_forward(x, w1, b1, w2, b2):
    h = jnp.maximum(x @ w1 + b1, 0.0)
    return h @ w2 + b2


if __name__ == "__main__":
    n_input, n_hidden, n_out = 1, 32, 1
    batch = 128

    key = jax.random.PRNGKey(0)
    k1, k2 = jax.random.split(key)
    w1, b1 = init_linear_params(k1, n_input, n_hidden)
    w2, b2 = init_linear_params(k2, n_hidden, n_out)

    # x = unsqueeze(linspace(-1, 1, batch), dim=1) -> (batch, 1)
    x = jnp.linspace(-1.0, 1.0, batch, dtype=jnp.float32).reshape(batch, 1)

    out = net_forward(x, w1, b1, w2, b2)
    out = jax.block_until_ready(out)

    ref = reference_forward(x, w1, b1, w2, b2)
    assert out.shape == (batch, n_out)
    assert jnp.allclose(out, ref, atol=1e-5, rtol=1e-5)

    print("KERNEL_OK")
</pallas_src>

<mosaic_0001>
module attributes {stable_mosaic.version = 11 : i64} {
  func.func @mlp_kernel(%arg0: memref<1x128xf32, #tpu.memory_space<vmem>>, %arg1: memref<32x2xf32, #tpu.memory_space<vmem>>, %arg2: memref<1x32xf32, #tpu.memory_space<vmem>>, %arg3: memref<1x1xf32, #tpu.memory_space<smem>>, %arg4: memref<1x128xf32, #tpu.memory_space<vmem>>) attributes {dimension_semantics = [], scalar_prefetch = 0 : i64, scratch_operands = 0 : i64, tpu.core_type = #tpu.core_type<tc>} {
    %c0 = arith.constant 0 : index
    %c0_0 = arith.constant 0 : index
    %0 = vector.load %arg0[%c0, %c0_0] : memref<1x128xf32, #tpu.memory_space<vmem>>, vector<1x128xf32>
    %c0_1 = arith.constant 0 : index
    %c0_2 = arith.constant 0 : index
    %1 = vector.load %arg1[%c0_1, %c0_2] : memref<32x2xf32, #tpu.memory_space<vmem>>, vector<32x1xf32>
    %c0_3 = arith.constant 0 : index
    %c1 = arith.constant 1 : index
    %2 = vector.load %arg1[%c0_3, %c1] : memref<32x2xf32, #tpu.memory_space<vmem>>, vector<32x1xf32>
    %3 = vector.broadcast %1 : vector<32x1xf32> to vector<32x128xf32>
    %4 = vector.broadcast %0 : vector<1x128xf32> to vector<32x128xf32>
    %5 = arith.mulf %3, %4 : vector<32x128xf32>
    %6 = vector.broadcast %2 : vector<32x1xf32> to vector<32x128xf32>
    %7 = arith.addf %5, %6 : vector<32x128xf32>
    %cst = arith.constant 0.000000e+00 : f32
    %8 = vector.broadcast %cst : f32 to vector<32x128xf32>
    %9 = arith.maximumf %7, %8 : vector<32x128xf32>
    %c0_4 = arith.constant 0 : index
    %c0_5 = arith.constant 0 : index
    %10 = vector.load %arg2[%c0_4, %c0_5] : memref<1x32xf32, #tpu.memory_space<vmem>>, vector<1x32xf32>
    %cst_6 = arith.constant dense<0.000000e+00> : vector<1x128xf32>
    %11 = tpu.matmul %10, %9, %cst_6 {dimension_numbers = #tpu.dot_dimension_numbers<[1], [0], [0], [1], [0, 0, 1, 1], [], []>} : vector<1x32xf32>, vector<32x128xf32>, vector<1x128xf32> -> vector<1x128xf32>
    %c0_7 = arith.constant 0 : index
    %c0_8 = arith.constant 0 : index
    %12 = memref.load %arg3[%c0_7, %c0_8] : memref<1x1xf32, #tpu.memory_space<smem>>
    %13 = vector.broadcast %12 : f32 to vector<1x128xf32>
    %14 = arith.addf %11, %13 : vector<1x128xf32>
    %c0_9 = arith.constant 0 : index
    %c0_10 = arith.constant 0 : index
    %15 = vector.load %arg4[%c0_9, %c0_10] : memref<1x128xf32, #tpu.memory_space<vmem>>, vector<1x128xf32>
    tpu.vector_store %arg4[%c0_9, %c0_10], %14 {strides = array<i32>} : memref<1x128xf32, #tpu.memory_space<vmem>>, vector<1x128xf32>,
    return
  }
}

</mosaic_0001>

<llo_original>
// kernel: tpu_custom_call.1
$region0: #{tpu_custom_call.1}
  #allocation0 [shape = 'u32[]', space=smem, size = 0x4, offset = 0x4, fixed_abs, tag = 'smem constant byte address 0x4 - core index']
  #allocation1 [shape = 'u32[72,128]{1,0:T(1,128)}', space=vmem, size = 0x9000, scoped, tag = 'internal scratch']
  #allocation2 [shape = 'f32[1,1]{1,0:T(1,128)S(6)}', space=smem, size = 0x200, scoped, tag = 'scoped memory for tpu_custom_call.1']
  %s0 = inlined_call_operand.vmem [shape: f32[1,128], index: 0, kind: input, shape index: {}]
  %s1 = inlined_call_operand.vmem [shape: f32[32,2], index: 1, kind: input, shape index: {}]
  %s2 = inlined_call_operand.vmem [shape: f32[1,32], index: 2, kind: input, shape index: {}]
  %s3 = inlined_call_operand.<no memory space> [shape: f32[1,1], index: 3, kind: input, shape index: {}]
  %s4 = inlined_call_operand.hbm [shape: f32[1,128], index: 4, kind: output, shape index: {}]
  %s5 = sld [smem:[#allocation0]]
  $region26: #{tpu_custom_call.1} parent=0
    _
  %s7 = ssub.s32 1, %s5
  %s8 = scalar_select 0, %s7, %s5
  %9 = sst [smem:[#allocation2]] %s3
  $region1: #{tpu_custom_call.1} parent=0
    #allocation3 [shape = 'u8[512]{0}', space=vmem, size = 0x400, scoped, tag = 'output window, operand 0, single buffered']
    #allocation4 [shape = 's32[1]{0}', space=sflag, size = 0x4, scoped, tag = 'scoped memory for tpu_custom_call.1']
    %10 = vsyncpa [#allocation4], 0
    // Predicated region
    $region2: #{tpu_custom_call.1} parent=1 // pred_check
      _
    $region3: #{tpu_custom_call.1} parent=1 // pred_check_branch
      %12 = sbr.rel (0) target = $region5
    $region4: #{tpu_custom_call.1} parent=1 // pred_region
      _
    $region5: #{tpu_custom_call.1} parent=1 // pred_fallthru
      _
    // Predicated region
    $region6: #{tpu_custom_call.1} parent=1 // pred_check
      _
    $region7: #{tpu_custom_call.1} parent=1 // pred_check_branch
      %14 = sbr.rel (0) target = $region9
    $region8: #{tpu_custom_call.1} parent=1 // pred_region
      _
    $region9: #{tpu_custom_call.1} parent=1 // pred_fallthru
      _
    // Predicated region
    $region10: #{tpu_custom_call.1} parent=1 // pred_check
      _
    $region11: #{tpu_custom_call.1} parent=1 // pred_check_branch
      %16 = sbr.rel (0) target = $region13
    $region12: #{tpu_custom_call.1} parent=1 // pred_region
      _
    $region13: #{tpu_custom_call.1} parent=1 // pred_fallthru
      _
    // Predicated region
    $region14: #{tpu_custom_call.1} parent=1 // pred_check
      _
    $region15: #{tpu_custom_call.1} parent=1 // pred_check_branch
      %18 = sbr.rel (0) target = $region17
    $region16: #{tpu_custom_call.1} parent=1 // pred_region
      _
    $region17: #{tpu_custom_call.1} parent=1 // pred_fallthru
      _
    %v19 = vld [vmem:[%s0] sm:$0x1]
    %v20 = vld [vmem:[%s1] sm:$0xff]
    %v21 = vld [vmem:[%s1 + $0x8] sm:$0xff]
    %v22 = vld [vmem:[%s1 + $0x10] sm:$0xff]
    %v23 = vld [vmem:[%s1 + $0x18] sm:$0xff]
    %25 = vset.pattern.permute.xlu0 0
    %26 = vperm.xlu0 %25, %v20
    %v27 = vpop.permute.xlu0 %26
    %30 = vset.pattern.permute.xlu0 0
    %31 = vperm.xlu0 %30, %v21
    %v32 = vpop.permute.xlu0 %31
    %35 = vset.pattern.permute.xlu0 0
    %36 = vperm.xlu0 %35, %v22
    %v37 = vpop.permute.xlu0 %36
    %40 = vset.pattern.permute.xlu0 0
    %41 = vperm.xlu0 %40, %v23
    %v42 = vpop.permute.xlu0 %41
    %v45 = vperm.slane %v19, 0
    %v47 = vmul.f32 %v27, %v45
    %v48 = vmul.f32 %v32, %v45
    %v49 = vmul.f32 %v37, %v45
    %v50 = vmul.f32 %v42, %v45
    %51 = vset.pattern.permute.xlu0 1
    %52 = vperm.xlu0 %51, %v20
    %v53 = vpop.permute.xlu0 %52
    %55 = vset.pattern.permute.xlu0 1
    %56 = vperm.xlu0 %55, %v21
    %v57 = vpop.permute.xlu0 %56
    %59 = vset.pattern.permute.xlu0 1
    %60 = vperm.xlu0 %59, %v22
    %v61 = vpop.permute.xlu0 %60
    %63 = vset.pattern.permute.xlu0 1
    %64 = vperm.xlu0 %63, %v23
    %v65 = vpop.permute.xlu0 %64
    %v67 = vadd.f32 %v47, %v53
    %v68 = vadd.f32 %v48, %v57
    %v69 = vadd.f32 %v49, %v61
    %v70 = vadd.f32 %v50, %v65
    %v71 = vmax.f32 %v67, 0.0
    %v72 = vmax.f32 %v68, 0.0
    %v73 = vmax.f32 %v69, 0.0
    %v74 = vmax.f32 %v70, 0.0
    %v75 = vld [vmem:[%s2] sm:$0x1]
    %s76 = sld [smem:[#allocation2]]
    %v77 = vstv %s76
    %vm78 = vcmask 261120
    %v80 = vsel %vm78, %v75, 0
    %82 = vmatpush.msra.mxu0 0.0
    %83 = vmatpush.msra.mxu0 0.0
    %84 = vmatpush.msra.mxu0 0.0
    %85 = vmatpush.msra.mxu0 0.0
    %86 = vmatpush.msra.mxu0 0.0
    %87 = vmatpush.msra.mxu0 0.0
    %88 = vmatpush.msra.mxu0 0.0
    %89 = vmatpush.msra.mxu0 0.0
    %90 = vmatpush.msra.mxu0 0.0
    %91 = vmatpush.msra.mxu0 0.0
    %92 = vmatpush.msra.mxu0 0.0
    %93 = vmatpush.msra.mxu0 0.0
    %94 = vmatpush.msra.mxu0 %v74
    %95 = vmatpush.msra.mxu0 %v73
    %96 = vmatpush.msra.mxu0 %v72
    %97 = vmatpush.msra.mxu0 %v71
    %98 = vmatmul.f32.gmra.mxu0 %v80
    %v99 = vpop.f32.mrf.mxu0
    %v100 = vadd.f32 %v77, %v99
    %101 = vdwg.mxu0
    %102 = vst [vmem:[#allocation3] sm:$0x1] %v100
    // Predicated region
    $region18: #{tpu_custom_call.1} parent=1 // pred_check
      _
    $region19: #{tpu_custom_call.1} parent=1 // pred_check_branch
      %104 = sbr.rel (0) target = $region21
    $region20: #{tpu_custom_call.1} parent=1 // pred_region
      %106 = vsyncadd [#allocation4], 0
      %s108 = sshll.u32 [#allocation3], 4
      %s109 = int_to_ptr.vmem [resolvable:$true] %s108
      %s110 = sshll.u32 %s4, 4
      %s111 = int_to_ptr.hbm [resolvable:$true] %s110
      %113 = dma.vmem_to_hbm [thread:$0]  %s109, 16, %s111, [#allocation4]
    $region21: #{tpu_custom_call.1} parent=1 // pred_fallthru
      _
    // Predicated region
    $region22: #{tpu_custom_call.1} parent=1 // pred_check
      _
    $region23: #{tpu_custom_call.1} parent=1 // pred_check_branch
      %115 = sbr.rel (0) target = $region25
    $region24: #{tpu_custom_call.1} parent=1 // pred_region
      %117 = dma.done [#allocation4], 16
    $region25: #{tpu_custom_call.1} parent=1 // pred_fallthru
      _
    %118 = vsyncpa [#allocation4], 1

</llo_original>
